<compile_context>
chip_gen: v5e
topology: v5e:2x2
jax: 0.10.0
libtpu: 0.0.40
codegen_flags: <defaults>
</compile_context>

<pallas_src>
import functools

import jax
import jax.numpy as jnp
from jax.experimental import pallas as pl
from jax.experimental.pallas import tpu as pltpu

_LANE = 128


def _round_up(n, m):
    return ((n + m - 1) // m) * m


def linear_kernel(x_ref, w_ref, b_ref, o_ref):
    # (TB, F) @ (F, Cp) on the MXU, f32 operands + f32 accumulation,
    # then an f32 bias add and a lane-dense store.
    acc = jnp.dot(x_ref[...], w_ref[...], preferred_element_type=jnp.float32)
    o_ref[...] = (acc + b_ref[...]).astype(o_ref.dtype)


def prepare_params(weight, bias):
    """One-time parameter prep, hoisted out of the per-call forward.

    weight: (C, F) f32 (PyTorch nn.Linear layout) -> (F, Cp) f32 with the
            class dim zero-padded to a multiple of 128 (lane-dense output).
    bias:   (C,) f32 -> (1, Cp) f32 resident row.
    """
    C, F = weight.shape
    Cp = _round_up(C, _LANE)
    wt = jnp.pad(weight.T, ((0, 0), (0, Cp - C)))        # (F, Cp), f32
    bp = jnp.pad(bias, (0, Cp - C)).reshape(1, Cp)       # (1, Cp), f32
    return wt, bp


@functools.partial(jax.jit, static_argnames=("num_classes", "block_batch"))
def softmax_regression_forward(x, wt, bp, *, num_classes, block_batch=512):
    """PyTorch-equivalent forward: logits = x @ weight.T + bias.

    x:  (B, F) f32
    wt: (F, Cp) f32  from prepare_params
    bp: (1, Cp) f32  from prepare_params
    returns (B, num_classes) f32
    """
    B, F = x.shape
    Fw, Cp = wt.shape
    assert Fw == F

    if B <= block_batch:
        # Small batch: one grid step covers everything, zero padding/copies.
        TB, Bp, xp = B, B, x
    else:
        # Large batch: 128/256-aligned tiles (block_batch should be a
        # multiple of 256 on v6e/v7x, 128 on v5e); pad batch only if needed.
        TB = block_batch
        Bp = _round_up(B, TB)
        xp = jnp.pad(x, ((0, Bp - B), (0, 0))) if Bp != B else x

    grid = (Bp // TB,)

    out_padded = pl.pallas_call(
        linear_kernel,
        out_shape=jax.ShapeDtypeStruct((Bp, Cp), jnp.float32),
        grid_spec=pltpu.PrefetchScalarGridSpec(
            num_scalar_prefetch=0,
            grid=grid,
            in_specs=[
                pl.BlockSpec((TB, F), lambda i: (i, 0)),   # streamed x tile
                pl.BlockSpec((F, Cp), lambda i: (0, 0)),   # resident weights
                pl.BlockSpec((1, Cp), lambda i: (0, 0)),   # resident bias row
            ],
            out_specs=pl.BlockSpec((TB, Cp), lambda i: (i, 0)),
        ),
        compiler_params=pltpu.CompilerParams(
            dimension_semantics=("parallel",),
        ),
    )(xp, wt, bp)

    return out_padded[:B, :num_classes]


def reference_forward(x, weight, bias):
    # Plain f32 reference matching the PyTorch module: x @ W.T + b.
    return jnp.dot(x, weight.T) + bias


if __name__ == "__main__":
    # Small MNIST-like shapes consistent with the module's forward.
    batch, num_features, num_classes = 128, 784, 10

    key = jax.random.PRNGKey(0)
    kx, kw, kx2 = jax.random.split(key, 3)

    x = jax.random.normal(kx, (batch, num_features), dtype=jnp.float32)
    # The module zero-inits weight/bias; use small random weights here so the
    # correctness check is non-trivial (forward semantics are identical).
    weight = 0.1 * jax.random.normal(
        kw, (num_classes, num_features), dtype=jnp.float32
    )
    bias = 0.01 * jnp.arange(num_classes, dtype=jnp.float32)

    # One-time parameter prep (outside the per-call path).
    wt, bp = prepare_params(weight, bias)

    # Single-step path (B <= block_batch).
    logits = softmax_regression_forward(x, wt, bp, num_classes=num_classes)
    jax.block_until_ready(logits)
    ref = reference_forward(x, weight, bias)
    assert logits.shape == (batch, num_classes)
    assert jnp.allclose(logits, ref, atol=5e-2, rtol=5e-2)

    # Multi-tile path with batch padding (B > block_batch, Bp = 384).
    x_big = jax.random.normal(kx2, (300, num_features), dtype=jnp.float32)
    logits_big = softmax_regression_forward(
        x_big, wt, bp, num_classes=num_classes, block_batch=128
    )
    jax.block_until_ready(logits_big)
    ref_big = reference_forward(x_big, weight, bias)
    assert logits_big.shape == (300, num_classes)
    assert jnp.allclose(logits_big, ref_big, atol=5e-2, rtol=5e-2)

    # Zero-init case exactly matching the module's __init__.
    zw, zb = prepare_params(
        jnp.zeros((num_classes, num_features), dtype=jnp.float32),
        jnp.zeros((num_classes,), dtype=jnp.float32),
    )
    zero_logits = softmax_regression_forward(x, zw, zb, num_classes=num_classes)
    jax.block_until_ready(zero_logits)
    assert jnp.allclose(zero_logits, jnp.zeros((batch, num_classes)), atol=1e-6)

    print("KERNEL_OK")
</pallas_src>

<mosaic_0001>
module attributes {stable_mosaic.version = 11 : i64} {
  func.func @linear_kernel(%arg0: i32, %arg1: memref<128x784xf32, #tpu.memory_space<vmem>>, %arg2: memref<784x128xf32, #tpu.memory_space<vmem>>, %arg3: memref<1x128xf32, #tpu.memory_space<vmem>>, %arg4: memref<128x128xf32, #tpu.memory_space<vmem>>) attributes {dimension_semantics = [#tpu.dimension_semantics<parallel>], iteration_bounds = array<i64: 1>, scalar_prefetch = 0 : i64, scratch_operands = 0 : i64, tpu.core_type = #tpu.core_type<tc>, window_params = [{transform_indices = @transform_0, window_bounds = array<i64: 128, 784>}, {pipeline_mode = #tpu.pipeline_mode<synchronous>, transform_indices = @transform_1, window_bounds = array<i64: 784, 128>}, {pipeline_mode = #tpu.pipeline_mode<synchronous>, transform_indices = @transform_2, window_bounds = array<i64: 1, 128>}, {transform_indices = @transform_3, window_bounds = array<i64: 128, 128>}]} {
    %c0 = arith.constant 0 : index
    %c0_0 = arith.constant 0 : index
    %0 = vector.load %arg1[%c0, %c0_0] : memref<128x784xf32, #tpu.memory_space<vmem>>, vector<128x784xf32>
    %c0_1 = arith.constant 0 : index
    %c0_2 = arith.constant 0 : index
    %1 = vector.load %arg2[%c0_1, %c0_2] : memref<784x128xf32, #tpu.memory_space<vmem>>, vector<784x128xf32>
    %cst = arith.constant dense<0.000000e+00> : vector<128x128xf32>
    %2 = tpu.matmul %0, %1, %cst {dimension_numbers = #tpu.dot_dimension_numbers<[1], [0], [0], [1], [0, 0, 1, 1], [], []>} : vector<128x784xf32>, vector<784x128xf32>, vector<128x128xf32> -> vector<128x128xf32>
    %c0_3 = arith.constant 0 : index
    %c0_4 = arith.constant 0 : index
    %3 = vector.load %arg3[%c0_3, %c0_4] : memref<1x128xf32, #tpu.memory_space<vmem>>, vector<1x128xf32>
    %4 = vector.broadcast %3 : vector<1x128xf32> to vector<128x128xf32>
    %5 = arith.addf %2, %4 : vector<128x128xf32>
    %c0_5 = arith.constant 0 : index
    %c0_6 = arith.constant 0 : index
    %6 = vector.load %arg4[%c0_5, %c0_6] : memref<128x128xf32, #tpu.memory_space<vmem>>, vector<128x128xf32>
    tpu.vector_store %arg4[%c0_5, %c0_6], %5 {strides = array<i32>} : memref<128x128xf32, #tpu.memory_space<vmem>>, vector<128x128xf32>,
    return
  }
  func.func @transform_0(%arg0: i32) -> (i32, i32) {
    %c0_i32 = arith.constant 0 : i32
    %c0_i32_0 = arith.constant 0 : i32
    return %arg0, %c0_i32 : i32, i32
  }
  func.func @transform_1(%arg0: i32) -> (i32, i32) {
    %c0_i32 = arith.constant 0 : i32
    %c0_i32_0 = arith.constant 0 : i32
    %c0_i32_1 = arith.constant 0 : i32
    return %c0_i32, %c0_i32_0 : i32, i32
  }
  func.func @transform_2(%arg0: i32) -> (i32, i32) {
    %c0_i32 = arith.constant 0 : i32
    %c0_i32_0 = arith.constant 0 : i32
    %c0_i32_1 = arith.constant 0 : i32
    return %c0_i32, %c0_i32_0 : i32, i32
  }
  func.func @transform_3(%arg0: i32) -> (i32, i32) {
    %c0_i32 = arith.constant 0 : i32
    %c0_i32_0 = arith.constant 0 : i32
    return %arg0, %c0_i32 : i32, i32
  }
}

</mosaic_0001>

<llo_original>
// kernel: softmax_regression_forward.1
$region0: #{softmax_regression_forward.1}
  #allocation0 [shape = 'u32[]', space=smem, size = 0x4, offset = 0x4, fixed_abs, tag = 'smem constant byte address 0x4 - core index']
  #allocation1 [shape = 'u32[72,128]{1,0:T(1,128)}', space=vmem, size = 0x9000, scoped, tag = 'internal scratch']
  %s0 = inlined_call_operand.vmem [shape: f32[128,784], index: 0, kind: input, shape index: {}]
  %s1 = inlined_call_operand.vmem [shape: f32[784,128], index: 1, kind: input, shape index: {}]
  %s2 = inlined_call_operand.vmem [shape: f32[1,128], index: 2, kind: input, shape index: {}]
  %s3 = inlined_call_operand.vmem [shape: f32[128,128], index: 3, kind: output, shape index: {}]
  %s4 = sld [smem:[#allocation0]]
  $region22: #{softmax_regression_forward.1} parent=0
    _
  %s6 = ssub.s32 1, %s4
  %s7 = scalar_select 0, %s6, %s4
  // Predicated region
  $region2: #{softmax_regression_forward.1} parent=0 // pred_check
    _
  $region3: #{softmax_regression_forward.1} parent=0 // pred_check_branch
    %9 = sbr.rel (0) target = $region5
  $region4: #{softmax_regression_forward.1} parent=0 // pred_region
    _
  $region5: #{softmax_regression_forward.1} parent=0 // pred_fallthru
    _
  // Predicated region
  $region6: #{softmax_regression_forward.1} parent=0 // pred_check
    _
  $region7: #{softmax_regression_forward.1} parent=0 // pred_check_branch
    %11 = sbr.rel (0) target = $region9
  $region8: #{softmax_regression_forward.1} parent=0 // pred_region
    _
  $region9: #{softmax_regression_forward.1} parent=0 // pred_fallthru
    _
  // Predicated region
  $region10: #{softmax_regression_forward.1} parent=0 // pred_check
    _
  $region11: #{softmax_regression_forward.1} parent=0 // pred_check_branch
    %13 = sbr.rel (0) target = $region13
  $region12: #{softmax_regression_forward.1} parent=0 // pred_region
    _
  $region13: #{softmax_regression_forward.1} parent=0 // pred_fallthru
    _
  %v14 = vld [vmem:[%s0] sm:$0xff]
  %v15 = vld [vmem:[%s0 + $0x8] sm:$0xff]
  %v16 = vld [vmem:[%s0 + $0x10] sm:$0xff]
  %v17 = vld [vmem:[%s0 + $0x18] sm:$0xff]
  %v18 = vld [vmem:[%s0 + $0x20] sm:$0xff]
  %v19 = vld [vmem:[%s0 + $0x28] sm:$0xff]
  %v20 = vld [vmem:[%s0 + $0x30] sm:$0xff]
  %v21 = vld [vmem:[%s0 + $0x38] sm:$0xff]
  %v22 = vld [vmem:[%s0 + $0x40] sm:$0xff]
  %v23 = vld [vmem:[%s0 + $0x48] sm:$0xff]
  %v24 = vld [vmem:[%s0 + $0x50] sm:$0xff]
  %v25 = vld [vmem:[%s0 + $0x58] sm:$0xff]
  %v26 = vld [vmem:[%s0 + $0x60] sm:$0xff]
  %v27 = vld [vmem:[%s0 + $0x68] sm:$0xff]
  %v28 = vld [vmem:[%s0 + $0x70] sm:$0xff]
  %v29 = vld [vmem:[%s0 + $0x78] sm:$0xff]
  %v30 = vld [vmem:[%s0 + $0x80] sm:$0xff]
  %v31 = vld [vmem:[%s0 + $0x88] sm:$0xff]
  %v32 = vld [vmem:[%s0 + $0x90] sm:$0xff]
  %v33 = vld [vmem:[%s0 + $0x98] sm:$0xff]
  %v34 = vld [vmem:[%s0 + $0xa0] sm:$0xff]
  %v35 = vld [vmem:[%s0 + $0xa8] sm:$0xff]
  %v36 = vld [vmem:[%s0 + $0xb0] sm:$0xff]
  %v37 = vld [vmem:[%s0 + $0xb8] sm:$0xff]
  %v38 = vld [vmem:[%s0 + $0xc0] sm:$0xff]
  %v39 = vld [vmem:[%s0 + $0xc8] sm:$0xff]
  %v40 = vld [vmem:[%s0 + $0xd0] sm:$0xff]
  %v41 = vld [vmem:[%s0 + $0xd8] sm:$0xff]
  %v42 = vld [vmem:[%s0 + $0xe0] sm:$0xff]
  %v43 = vld [vmem:[%s0 + $0xe8] sm:$0xff]
  %v44 = vld [vmem:[%s0 + $0xf0] sm:$0xff]
  %v45 = vld [vmem:[%s0 + $0xf8] sm:$0xff]
  %v46 = vld [vmem:[%s0 + $0x100] sm:$0xff]
  %v47 = vld [vmem:[%s0 + $0x108] sm:$0xff]
  %v48 = vld [vmem:[%s0 + $0x110] sm:$0xff]
  %v49 = vld [vmem:[%s0 + $0x118] sm:$0xff]
  %v50 = vld [vmem:[%s0 + $0x120] sm:$0xff]
  %v51 = vld [vmem:[%s0 + $0x128] sm:$0xff]
  %v52 = vld [vmem:[%s0 + $0x130] sm:$0xff]
  %v53 = vld [vmem:[%s0 + $0x138] sm:$0xff]
  %v54 = vld [vmem:[%s0 + $0x140] sm:$0xff]
  %v55 = vld [vmem:[%s0 + $0x148] sm:$0xff]
  %v56 = vld [vmem:[%s0 + $0x150] sm:$0xff]
  %v57 = vld [vmem:[%s0 + $0x158] sm:$0xff]
  %v58 = vld [vmem:[%s0 + $0x160] sm:$0xff]
  %v59 = vld [vmem:[%s0 + $0x168] sm:$0xff]
  %v60 = vld [vmem:[%s0 + $0x170] sm:$0xff]
  %v61 = vld [vmem:[%s0 + $0x178] sm:$0xff]
  %v62 = vld [vmem:[%s0 + $0x180] sm:$0xff]
  %v63 = vld [vmem:[%s0 + $0x188] sm:$0xff]
  %v64 = vld [vmem:[%s0 + $0x190] sm:$0xff]
  %v65 = vld [vmem:[%s0 + $0x198] sm:$0xff]
  %v66 = vld [vmem:[%s0 + $0x1a0] sm:$0xff]
  %v67 = vld [vmem:[%s0 + $0x1a8] sm:$0xff]
  %v68 = vld [vmem:[%s0 + $0x1b0] sm:$0xff]
  %v69 = vld [vmem:[%s0 + $0x1b8] sm:$0xff]
  %v70 = vld [vmem:[%s0 + $0x1c0] sm:$0xff]
  %v71 = vld [vmem:[%s0 + $0x1c8] sm:$0xff]
  %v72 = vld [vmem:[%s0 + $0x1d0] sm:$0xff]
  %v73 = vld [vmem:[%s0 + $0x1d8] sm:$0xff]
  %v74 = vld [vmem:[%s0 + $0x1e0] sm:$0xff]
  %v75 = vld [vmem:[%s0 + $0x1e8] sm:$0xff]
  %v76 = vld [vmem:[%s0 + $0x1f0] sm:$0xff]
  %v77 = vld [vmem:[%s0 + $0x1f8] sm:$0xff]
  %v78 = vld [vmem:[%s0 + $0x200] sm:$0xff]
  %v79 = vld [vmem:[%s0 + $0x208] sm:$0xff]
  %v80 = vld [vmem:[%s0 + $0x210] sm:$0xff]
  %v81 = vld [vmem:[%s0 + $0x218] sm:$0xff]
  %v82 = vld [vmem:[%s0 + $0x220] sm:$0xff]
  %v83 = vld [vmem:[%s0 + $0x228] sm:$0xff]
  %v84 = vld [vmem:[%s0 + $0x230] sm:$0xff]
  %v85 = vld [vmem:[%s0 + $0x238] sm:$0xff]
  %v86 = vld [vmem:[%s0 + $0x240] sm:$0xff]
  %v87 = vld [vmem:[%s0 + $0x248] sm:$0xff]
  %v88 = vld [vmem:[%s0 + $0x250] sm:$0xff]
  %v89 = vld [vmem:[%s0 + $0x258] sm:$0xff]
  %v90 = vld [vmem:[%s0 + $0x260] sm:$0xff]
  %v91 = vld [vmem:[%s0 + $0x268] sm:$0xff]
  %v92 = vld [vmem:[%s0 + $0x270] sm:$0xff]
  %v93 = vld [vmem:[%s0 + $0x278] sm:$0xff]
  %v94 = vld [vmem:[%s0 + $0x280] sm:$0xff]
  %v95 = vld [vmem:[%s0 + $0x288] sm:$0xff]
  %v96 = vld [vmem:[%s0 + $0x290] sm:$0xff]
  %v97 = vld [vmem:[%s0 + $0x298] sm:$0xff]
  %v98 = vld [vmem:[%s0 + $0x2a0] sm:$0xff]
  %v99 = vld [vmem:[%s0 + $0x2a8] sm:$0xff]
  %v100 = vld [vmem:[%s0 + $0x2b0] sm:$0xff]
  %v101 = vld [vmem:[%s0 + $0x2b8] sm:$0xff]
  %v102 = vld [vmem:[%s0 + $0x2c0] sm:$0xff]
  %v103 = vld [vmem:[%s0 + $0x2c8] sm:$0xff]
  %v104 = vld [vmem:[%s0 + $0x2d0] sm:$0xff]
  %v105 = vld [vmem:[%s0 + $0x2d8] sm:$0xff]
  %v106 = vld [vmem:[%s0 + $0x2e0] sm:$0xff]
  %v107 = vld [vmem:[%s0 + $0x2e8] sm:$0xff]
  %v108 = vld [vmem:[%s0 + $0x2f0] sm:$0xff]
  %v109 = vld [vmem:[%s0 + $0x2f8] sm:$0xff]
  %v110 = vld [vmem:[%s0 + $0x300] sm:$0xff]
  %v111 = vld [vmem:[%s0 + $0x308] sm:$0xff]
  %v112 = vld [vmem:[%s0 + $0x310] sm:$0xff]
  %v113 = vld [vmem:[%s0 + $0x318] sm:$0xff]
  %v114 = vld [vmem:[%s0 + $0x320] sm:$0xff]
  %v115 = vld [vmem:[%s0 + $0x328] sm:$0xff]
  %v116 = vld [vmem:[%s0 + $0x330] sm:$0xff]
  %v117 = vld [vmem:[%s0 + $0x338] sm:$0xff]
  %v118 = vld [vmem:[%s0 + $0x340] sm:$0xff]
  %v119 = vld [vmem:[%s0 + $0x348] sm:$0xff]
  %v120 = vld [vmem:[%s0 + $0x350] sm:$0xff]
  %v121 = vld [vmem:[%s0 + $0x358] sm:$0xff]
  %v122 = vld [vmem:[%s0 + $0x360] sm:$0xff]
  %v123 = vld [vmem:[%s0 + $0x368] sm:$0xff]
  %v124 = vld [vmem:[%s0 + $0x370] sm:$0xff]
  %v125 = vld [vmem:[%s0 + $0x378] sm:$0xff]
  %v126 = vld [vmem:[%s1] sm:$0xff]
  %v127 = vld [vmem:[%s1 + $0x8] sm:$0xff]
  %v128 = vld [vmem:[%s1 + $0x10] sm:$0xff]
  %v129 = vld [vmem:[%s1 + $0x18] sm:$0xff]
  %v130 = vld [vmem:[%s1 + $0x20] sm:$0xff]
  %v131 = vld [vmem:[%s1 + $0x28] sm:$0xff]
  %v132 = vld [vmem:[%s1 + $0x30] sm:$0xff]
  %v133 = vld [vmem:[%s1 + $0x38] sm:$0xff]
  %v134 = vld [vmem:[%s1 + $0x40] sm:$0xff]
  %v135 = vld [vmem:[%s1 + $0x48] sm:$0xff]
  %v136 = vld [vmem:[%s1 + $0x50] sm:$0xff]
  %v137 = vld [vmem:[%s1 + $0x58] sm:$0xff]
  %v138 = vld [vmem:[%s1 + $0x60] sm:$0xff]
  %v139 = vld [vmem:[%s1 + $0x68] sm:$0xff]
  %v140 = vld [vmem:[%s1 + $0x70] sm:$0xff]
  %v141 = vld [vmem:[%s1 + $0x78] sm:$0xff]
  %v142 = vld [vmem:[%s1 + $0x80] sm:$0xff]
  %v143 = vld [vmem:[%s1 + $0x88] sm:$0xff]
  %v144 = vld [vmem:[%s1 + $0x90] sm:$0xff]
  %v145 = vld [vmem:[%s1 + $0x98] sm:$0xff]
  %v146 = vld [vmem:[%s1 + $0xa0] sm:$0xff]
  %v147 = vld [vmem:[%s1 + $0xa8] sm:$0xff]
  %v148 = vld [vmem:[%s1 + $0xb0] sm:$0xff]
  %v149 = vld [vmem:[%s1 + $0xb8] sm:$0xff]
  %v150 = vld [vmem:[%s1 + $0xc0] sm:$0xff]
  %v151 = vld [vmem:[%s1 + $0xc8] sm:$0xff]
  %v152 = vld [vmem:[%s1 + $0xd0] sm:$0xff]
  %v153 = vld [vmem:[%s1 + $0xd8] sm:$0xff]
  %v154 = vld [vmem:[%s1 + $0xe0] sm:$0xff]
  %v155 = vld [vmem:[%s1 + $0xe8] sm:$0xff]
  %v156 = vld [vmem:[%s1 + $0xf0] sm:$0xff]
  %v157 = vld [vmem:[%s1 + $0xf8] sm:$0xff]
  %v158 = vld [vmem:[%s1 + $0x100] sm:$0xff]
  %v159 = vld [vmem:[%s1 + $0x108] sm:$0xff]
  %v160 = vld [vmem:[%s1 + $0x110] sm:$0xff]
  %v161 = vld [vmem:[%s1 + $0x118] sm:$0xff]
  %v162 = vld [vmem:[%s1 + $0x120] sm:$0xff]
  %v163 = vld [vmem:[%s1 + $0x128] sm:$0xff]
  %v164 = vld [vmem:[%s1 + $0x130] sm:$0xff]
  %v165 = vld [vmem:[%s1 + $0x138] sm:$0xff]
  %v166 = vld [vmem:[%s1 + $0x140] sm:$0xff]
  %v167 = vld [vmem:[%s1 + $0x148] sm:$0xff]
  %v168 = vld [vmem:[%s1 + $0x150] sm:$0xff]
  %v169 = vld [vmem:[%s1 + $0x158] sm:$0xff]
  %v170 = vld [vmem:[%s1 + $0x160] sm:$0xff]
  %v171 = vld [vmem:[%s1 + $0x168] sm:$0xff]
  %v172 = vld [vmem:[%s1 + $0x170] sm:$0xff]
  %v173 = vld [vmem:[%s1 + $0x178] sm:$0xff]
  %v174 = vld [vmem:[%s1 + $0x180] sm:$0xff]
  %v175 = vld [vmem:[%s1 + $0x188] sm:$0xff]
  %v176 = vld [vmem:[%s1 + $0x190] sm:$0xff]
  %v177 = vld [vmem:[%s1 + $0x198] sm:$0xff]
  %v178 = vld [vmem:[%s1 + $0x1a0] sm:$0xff]
  %v179 = vld [vmem:[%s1 + $0x1a8] sm:$0xff]
  %v180 = vld [vmem:[%s1 + $0x1b0] sm:$0xff]
  %v181 = vld [vmem:[%s1 + $0x1b8] sm:$0xff]
  %v182 = vld [vmem:[%s1 + $0x1c0] sm:$0xff]
  %v183 = vld [vmem:[%s1 + $0x1c8] sm:$0xff]
  %v184 = vld [vmem:[%s1 + $0x1d0] sm:$0xff]
  %v185 = vld [vmem:[%s1 + $0x1d8] sm:$0xff]
  %v186 = vld [vmem:[%s1 + $0x1e0] sm:$0xff]
  %v187 = vld [vmem:[%s1 + $0x1e8] sm:$0xff]
  %v188 = vld [vmem:[%s1 + $0x1f0] sm:$0xff]
  %v189 = vld [vmem:[%s1 + $0x1f8] sm:$0xff]
  %v190 = vld [vmem:[%s1 + $0x200] sm:$0xff]
  %v191 = vld [vmem:[%s1 + $0x208] sm:$0xff]
  %v192 = vld [vmem:[%s1 + $0x210] sm:$0xff]
  %v193 = vld [vmem:[%s1 + $0x218] sm:$0xff]
  %v194 = vld [vmem:[%s1 + $0x220] sm:$0xff]
  %v195 = vld [vmem:[%s1 + $0x228] sm:$0xff]
  %v196 = vld [vmem:[%s1 + $0x230] sm:$0xff]
  %v197 = vld [vmem:[%s1 + $0x238] sm:$0xff]
  %v198 = vld [vmem:[%s1 + $0x240] sm:$0xff]
  %v199 = vld [vmem:[%s1 + $0x248] sm:$0xff]
  %v200 = vld [vmem:[%s1 + $0x250] sm:$0xff]
  %v201 = vld [vmem:[%s1 + $0x258] sm:$0xff]
  %v202 = vld [vmem:[%s1 + $0x260] sm:$0xff]
  %v203 = vld [vmem:[%s1 + $0x268] sm:$0xff]
  %v204 = vld [vmem:[%s1 + $0x270] sm:$0xff]
  %v205 = vld [vmem:[%s1 + $0x278] sm:$0xff]
  %v206 = vld [vmem:[%s1 + $0x280] sm:$0xff]
  %v207 = vld [vmem:[%s1 + $0x288] sm:$0xff]
  %v208 = vld [vmem:[%s1 + $0x290] sm:$0xff]
  %v209 = vld [vmem:[%s1 + $0x298] sm:$0xff]
  %v210 = vld [vmem:[%s1 + $0x2a0] sm:$0xff]
  %v211 = vld [vmem:[%s1 + $0x2a8] sm:$0xff]
  %v212 = vld [vmem:[%s1 + $0x2b0] sm:$0xff]
  %v213 = vld [vmem:[%s1 + $0x2b8] sm:$0xff]
  %v214 = vld [vmem:[%s1 + $0x2c0] sm:$0xff]
  %v215 = vld [vmem:[%s1 + $0x2c8] sm:$0xff]
  %v216 = vld [vmem:[%s1 + $0x2d0] sm:$0xff]
  %v217 = vld [vmem:[%s1 + $0x2d8] sm:$0xff]
  %v218 = vld [vmem:[%s1 + $0x2e0] sm:$0xff]
  %v219 = vld [vmem:[%s1 + $0x2e8] sm:$0xff]
  %v220 = vld [vmem:[%s1 + $0x2f0] sm:$0xff]
  %v221 = vld [vmem:[%s1 + $0x2f8] sm:$0xff]
  %v222 = vld [vmem:[%s1 + $0x300] sm:$0xff]
  %v223 = vld [vmem:[%s1 + $0x308] sm:$0xff]
  %v224 = vld [vmem:[%s2] sm:$0x1]
  %v226 = vperm.slane %v224, 0
  %vm228 = vcmask 130048
  %v230 = vsel %vm228, %v20, 0
  %v233 = vsel %vm228, %v27, 0
  %v236 = vsel %vm228, %v34, 0
  %v239 = vsel %vm228, %v41, 0
  %v242 = vsel %vm228, %v48, 0
  %v245 = vsel %vm228, %v55, 0
  %v248 = vsel %vm228, %v62, 0
  %v251 = vsel %vm228, %v69, 0
  %v254 = vsel %vm228, %v76, 0
  %v257 = vsel %vm228, %v83, 0
  %v260 = vsel %vm228, %v90, 0
  %v263 = vsel %vm228, %v97, 0
  %v266 = vsel %vm228, %v104, 0
  %v269 = vsel %vm228, %v111, 0
  %v272 = vsel %vm228, %v118, 0
  %v275 = vsel %vm228, %v125, 0
  %277 = vmatpush.msra.mxu0 %v141
  %278 = vmatpush.msra.mxu0 %v140
  %279 = vmatpush.msra.mxu0 %v139
  %280 = vmatpush.msra.mxu0 %v138
  %281 = vmatpush.msra.mxu0 %v137
  %282 = vmatpush.msra.mxu0 %v136
  %283 = vmatpush.msra.mxu0 %v135
  %284 = vmatpush.msra.mxu0 %v134
  %285 = vmatpush.msra.mxu0 %v133
  %286 = vmatpush.msra.mxu0 %v132
  %287 = vmatpush.msra.mxu0 %v131
  %288 = vmatpush.msra.mxu0 %v130
  %289 = vmatpush.msra.mxu0 %v129
  %290 = vmatpush.msra.mxu0 %v128
  %291 = vmatpush.msra.mxu0 %v127
  %292 = vmatpush.msra.mxu0 %v126
  %293 = vmatmul.f32.gmra.mxu0 %v14
  %v294 = vpop.f32.mrf.mxu0
  %v295 = vadd.f32 %v226, %v294
  %296 = vmatmul.f32.gmra.mxu0 %v21
  %v297 = vpop.f32.mrf.mxu0
  %v298 = vadd.f32 %v226, %v297
  %299 = vmatmul.f32.gmra.mxu0 %v28
  %v300 = vpop.f32.mrf.mxu0
  %v301 = vadd.f32 %v226, %v300
  %302 = vmatmul.f32.gmra.mxu0 %v35
  %v303 = vpop.f32.mrf.mxu0
  %v304 = vadd.f32 %v226, %v303
  %305 = vmatmul.f32.gmra.mxu0 %v42
  %v306 = vpop.f32.mrf.mxu0
  %v307 = vadd.f32 %v226, %v306
  %308 = vmatmul.f32.gmra.mxu0 %v49
  %v309 = vpop.f32.mrf.mxu0
  %v310 = vadd.f32 %v226, %v309
  %311 = vmatmul.f32.gmra.mxu0 %v56
  %v312 = vpop.f32.mrf.mxu0
  %v313 = vadd.f32 %v226, %v312
  %314 = vmatmul.f32.gmra.mxu0 %v63
  %v315 = vpop.f32.mrf.mxu0
  %v316 = vadd.f32 %v226, %v315
  %317 = vmatmul.f32.gmra.mxu0 %v70
  %v318 = vpop.f32.mrf.mxu0
  %v319 = vadd.f32 %v226, %v318
  %320 = vmatmul.f32.gmra.mxu0 %v77
  %v321 = vpop.f32.mrf.mxu0
  %v322 = vadd.f32 %v226, %v321
  %323 = vmatmul.f32.gmra.mxu0 %v84
  %v324 = vpop.f32.mrf.mxu0
  %v325 = vadd.f32 %v226, %v324
  %326 = vmatmul.f32.gmra.mxu0 %v91
  %v327 = vpop.f32.mrf.mxu0
  %v328 = vadd.f32 %v226, %v327
  %329 = vmatmul.f32.gmra.mxu0 %v98
  %v330 = vpop.f32.mrf.mxu0
  %v331 = vadd.f32 %v226, %v330
  %332 = vmatmul.f32.gmra.mxu0 %v105
  %v333 = vpop.f32.mrf.mxu0
  %v334 = vadd.f32 %v226, %v333
  %335 = vmatmul.f32.gmra.mxu0 %v112
  %v336 = vpop.f32.mrf.mxu0
  %v337 = vadd.f32 %v226, %v336
  %338 = vmatmul.f32.gmra.mxu0 %v119
  %v339 = vpop.f32.mrf.mxu0
  %v340 = vadd.f32 %v226, %v339
  %341 = vdwg.mxu0
  %342 = vmatpush.msra.mxu0 %v157
  %343 = vmatpush.msra.mxu0 %v156
  %344 = vmatpush.msra.mxu0 %v155
  %345 = vmatpush.msra.mxu0 %v154
  %346 = vmatpush.msra.mxu0 %v153
  %347 = vmatpush.msra.mxu0 %v152
  %348 = vmatpush.msra.mxu0 %v151
  %349 = vmatpush.msra.mxu0 %v150
  %350 = vmatpush.msra.mxu0 %v149
  %351 = vmatpush.msra.mxu0 %v148
  %352 = vmatpush.msra.mxu0 %v147
  %353 = vmatpush.msra.mxu0 %v146
  %354 = vmatpush.msra.mxu0 %v145
  %355 = vmatpush.msra.mxu0 %v144
  %356 = vmatpush.msra.mxu0 %v143
  %357 = vmatpush.msra.mxu0 %v142
  %358 = vmatmul.f32.gmra.mxu0 %v15
  %v359 = vpop.f32.mrf.mxu0
  %v360 = vadd.f32 %v295, %v359
  %361 = vmatmul.f32.gmra.mxu0 %v22
  %v362 = vpop.f32.mrf.mxu0
  %v363 = vadd.f32 %v298, %v362
  %364 = vmatmul.f32.gmra.mxu0 %v29
  %v365 = vpop.f32.mrf.mxu0
  %v366 = vadd.f32 %v301, %v365
  %367 = vmatmul.f32.gmra.mxu0 %v36
  %v368 = vpop.f32.mrf.mxu0
  %v369 = vadd.f32 %v304, %v368
  %370 = vmatmul.f32.gmra.mxu0 %v43
  %v371 = vpop.f32.mrf.mxu0
  %v372 = vadd.f32 %v307, %v371
  %373 = vmatmul.f32.gmra.mxu0 %v50
  %v374 = vpop.f32.mrf.mxu0
  %v375 = vadd.f32 %v310, %v374
  %376 = vmatmul.f32.gmra.mxu0 %v57
  %v377 = vpop.f32.mrf.mxu0
  %v378 = vadd.f32 %v313, %v377
  %379 = vmatmul.f32.gmra.mxu0 %v64
  %v380 = vpop.f32.mrf.mxu0
  %v381 = vadd.f32 %v316, %v380
  %382 = vmatmul.f32.gmra.mxu0 %v71
  %v383 = vpop.f32.mrf.mxu0
  %v384 = vadd.f32 %v319, %v383
  %385 = vmatmul.f32.gmra.mxu0 %v78
  %v386 = vpop.f32.mrf.mxu0
  %v387 = vadd.f32 %v322, %v386
  %388 = vmatmul.f32.gmra.mxu0 %v85
  %v389 = vpop.f32.mrf.mxu0
  %v390 = vadd.f32 %v325, %v389
  %391 = vmatmul.f32.gmra.mxu0 %v92
  %v392 = vpop.f32.mrf.mxu0
  %v393 = vadd.f32 %v328, %v392
  %394 = vmatmul.f32.gmra.mxu0 %v99
  %v395 = vpop.f32.mrf.mxu0
  %v396 = vadd.f32 %v331, %v395
  %397 = vmatmul.f32.gmra.mxu0 %v106
  %v398 = vpop.f32.mrf.mxu0
  %v399 = vadd.f32 %v334, %v398
  %400 = vmatmul.f32.gmra.mxu0 %v113
  %v401 = vpop.f32.mrf.mxu0
  %v402 = vadd.f32 %v337, %v401
  %403 = vmatmul.f32.gmra.mxu0 %v120
  %v404 = vpop.f32.mrf.mxu0
  %v405 = vadd.f32 %v340, %v404
  %406 = vdwg.mxu0
  %407 = vmatpush.msra.mxu0 %v173
  %408 = vmatpush.msra.mxu0 %v172
  %409 = vmatpush.msra.mxu0 %v171
  %410 = vmatpush.msra.mxu0 %v170
  %411 = vmatpush.msra.mxu0 %v169
  %412 = vmatpush.msra.mxu0 %v168
  %413 = vmatpush.msra.mxu0 %v167
  %414 = vmatpush.msra.mxu0 %v166
  %415 = vmatpush.msra.mxu0 %v165
  %416 = vmatpush.msra.mxu0 %v164
  %417 = vmatpush.msra.mxu0 %v163
  %418 = vmatpush.msra.mxu0 %v162
  %419 = vmatpush.msra.mxu0 %v161
  %420 = vmatpush.msra.mxu0 %v160
  %421 = vmatpush.msra.mxu0 %v159
  %422 = vmatpush.msra.mxu0 %v158
  %423 = vmatmul.f32.gmra.mxu0 %v16
  %v424 = vpop.f32.mrf.mxu0
  %v425 = vadd.f32 %v360, %v424
  %426 = vmatmul.f32.gmra.mxu0 %v23
  %v427 = vpop.f32.mrf.mxu0
  %v428 = vadd.f32 %v363, %v427
  %429 = vmatmul.f32.gmra.mxu0 %v30
  %v430 = vpop.f32.mrf.mxu0
  %v431 = vadd.f32 %v366, %v430
  %432 = vmatmul.f32.gmra.mxu0 %v37
  %v433 = vpop.f32.mrf.mxu0
  %v434 = vadd.f32 %v369, %v433
  %435 = vmatmul.f32.gmra.mxu0 %v44
  %v436 = vpop.f32.mrf.mxu0
  %v437 = vadd.f32 %v372, %v436
  %438 = vmatmul.f32.gmra.mxu0 %v51
  %v439 = vpop.f32.mrf.mxu0
  %v440 = vadd.f32 %v375, %v439
  %441 = vmatmul.f32.gmra.mxu0 %v58
  %v442 = vpop.f32.mrf.mxu0
  %v443 = vadd.f32 %v378, %v442
  %444 = vmatmul.f32.gmra.mxu0 %v65
  %v445 = vpop.f32.mrf.mxu0
  %v446 = vadd.f32 %v381, %v445
  %447 = vmatmul.f32.gmra.mxu0 %v72
  %v448 = vpop.f32.mrf.mxu0
  %v449 = vadd.f32 %v384, %v448
  %450 = vmatmul.f32.gmra.mxu0 %v79
  %v451 = vpop.f32.mrf.mxu0
  %v452 = vadd.f32 %v387, %v451
  %453 = vmatmul.f32.gmra.mxu0 %v86
  %v454 = vpop.f32.mrf.mxu0
  %v455 = vadd.f32 %v390, %v454
  %456 = vmatmul.f32.gmra.mxu0 %v93
  %v457 = vpop.f32.mrf.mxu0
  %v458 = vadd.f32 %v393, %v457
  %459 = vmatmul.f32.gmra.mxu0 %v100
  %v460 = vpop.f32.mrf.mxu0
  %v461 = vadd.f32 %v396, %v460
  %462 = vmatmul.f32.gmra.mxu0 %v107
  %v463 = vpop.f32.mrf.mxu0
  %v464 = vadd.f32 %v399, %v463
  %465 = vmatmul.f32.gmra.mxu0 %v114
  %v466 = vpop.f32.mrf.mxu0
  %v467 = vadd.f32 %v402, %v466
  %468 = vmatmul.f32.gmra.mxu0 %v121
  %v469 = vpop.f32.mrf.mxu0
  %v470 = vadd.f32 %v405, %v469
  %471 = vdwg.mxu0
  %472 = vmatpush.msra.mxu0 %v189
  %473 = vmatpush.msra.mxu0 %v188
  %474 = vmatpush.msra.mxu0 %v187
  %475 = vmatpush.msra.mxu0 %v186
  %476 = vmatpush.msra.mxu0 %v185
  %477 = vmatpush.msra.mxu0 %v184
  %478 = vmatpush.msra.mxu0 %v183
  %479 = vmatpush.msra.mxu0 %v182
  %480 = vmatpush.msra.mxu0 %v181
  %481 = vmatpush.msra.mxu0 %v180
  %482 = vmatpush.msra.mxu0 %v179
  %483 = vmatpush.msra.mxu0 %v178
  %484 = vmatpush.msra.mxu0 %v177
  %485 = vmatpush.msra.mxu0 %v176
  %486 = vmatpush.msra.mxu0 %v175
  %487 = vmatpush.msra.mxu0 %v174
  %488 = vmatmul.f32.gmra.mxu0 %v17
  %v489 = vpop.f32.mrf.mxu0
  %v490 = vadd.f32 %v425, %v489
  %491 = vmatmul.f32.gmra.mxu0 %v24
  %v492 = vpop.f32.mrf.mxu0
  %v493 = vadd.f32 %v428, %v492
  %494 = vmatmul.f32.gmra.mxu0 %v31
  %v495 = vpop.f32.mrf.mxu0
  %v496 = vadd.f32 %v431, %v495
  %497 = vmatmul.f32.gmra.mxu0 %v38
  %v498 = vpop.f32.mrf.mxu0
  %v499 = vadd.f32 %v434, %v498
  %500 = vmatmul.f32.gmra.mxu0 %v45
  %v501 = vpop.f32.mrf.mxu0
  %v502 = vadd.f32 %v437, %v501
  %503 = vmatmul.f32.gmra.mxu0 %v52
  %v504 = vpop.f32.mrf.mxu0
  %v505 = vadd.f32 %v440, %v504
  %506 = vmatmul.f32.gmra.mxu0 %v59
  %v507 = vpop.f32.mrf.mxu0
  %v508 = vadd.f32 %v443, %v507
  %509 = vmatmul.f32.gmra.mxu0 %v66
  %v510 = vpop.f32.mrf.mxu0
  %v511 = vadd.f32 %v446, %v510
  %512 = vmatmul.f32.gmra.mxu0 %v73
  %v513 = vpop.f32.mrf.mxu0
  %v514 = vadd.f32 %v449, %v513
  %515 = vmatmul.f32.gmra.mxu0 %v80
  %v516 = vpop.f32.mrf.mxu0
  %v517 = vadd.f32 %v452, %v516
  %518 = vmatmul.f32.gmra.mxu0 %v87
  %v519 = vpop.f32.mrf.mxu0
  %v520 = vadd.f32 %v455, %v519
  %521 = vmatmul.f32.gmra.mxu0 %v94
  %v522 = vpop.f32.mrf.mxu0
  %v523 = vadd.f32 %v458, %v522
  %524 = vmatmul.f32.gmra.mxu0 %v101
  %v525 = vpop.f32.mrf.mxu0
  %v526 = vadd.f32 %v461, %v525
  %527 = vmatmul.f32.gmra.mxu0 %v108
  %v528 = vpop.f32.mrf.mxu0
  %v529 = vadd.f32 %v464, %v528
  %530 = vmatmul.f32.gmra.mxu0 %v115
  %v531 = vpop.f32.mrf.mxu0
  %v532 = vadd.f32 %v467, %v531
  %533 = vmatmul.f32.gmra.mxu0 %v122
  %v534 = vpop.f32.mrf.mxu0
  %v535 = vadd.f32 %v470, %v534
  %536 = vdwg.mxu0
  %537 = vmatpush.msra.mxu0 %v205
  %538 = vmatpush.msra.mxu0 %v204
  %539 = vmatpush.msra.mxu0 %v203
  %540 = vmatpush.msra.mxu0 %v202
  %541 = vmatpush.msra.mxu0 %v201
  %542 = vmatpush.msra.mxu0 %v200
  %543 = vmatpush.msra.mxu0 %v199
  %544 = vmatpush.msra.mxu0 %v198
  %545 = vmatpush.msra.mxu0 %v197
  %546 = vmatpush.msra.mxu0 %v196
  %547 = vmatpush.msra.mxu0 %v195
  %548 = vmatpush.msra.mxu0 %v194
  %549 = vmatpush.msra.mxu0 %v193
  %550 = vmatpush.msra.mxu0 %v192
  %551 = vmatpush.msra.mxu0 %v191
  %552 = vmatpush.msra.mxu0 %v190
  %553 = vmatmul.f32.gmra.mxu0 %v18
  %v554 = vpop.f32.mrf.mxu0
  %v555 = vadd.f32 %v490, %v554
  %556 = vmatmul.f32.gmra.mxu0 %v25
  %v557 = vpop.f32.mrf.mxu0
  %v558 = vadd.f32 %v493, %v557
  %559 = vmatmul.f32.gmra.mxu0 %v32
  %v560 = vpop.f32.mrf.mxu0
  %v561 = vadd.f32 %v496, %v560
  %562 = vmatmul.f32.gmra.mxu0 %v39
  %v563 = vpop.f32.mrf.mxu0
  %v564 = vadd.f32 %v499, %v563
  %565 = vmatmul.f32.gmra.mxu0 %v46
  %v566 = vpop.f32.mrf.mxu0
  %v567 = vadd.f32 %v502, %v566
  %568 = vmatmul.f32.gmra.mxu0 %v53
  %v569 = vpop.f32.mrf.mxu0
  %v570 = vadd.f32 %v505, %v569
  %571 = vmatmul.f32.gmra.mxu0 %v60
  %v572 = vpop.f32.mrf.mxu0
  %v573 = vadd.f32 %v508, %v572
  %574 = vmatmul.f32.gmra.mxu0 %v67
  %v575 = vpop.f32.mrf.mxu0
  %v576 = vadd.f32 %v511, %v575
  %577 = vmatmul.f32.gmra.mxu0 %v74
  %v578 = vpop.f32.mrf.mxu0
  %v579 = vadd.f32 %v514, %v578
  %580 = vmatmul.f32.gmra.mxu0 %v81
  %v581 = vpop.f32.mrf.mxu0
  %v582 = vadd.f32 %v517, %v581
  %583 = vmatmul.f32.gmra.mxu0 %v88
  %v584 = vpop.f32.mrf.mxu0
  %v585 = vadd.f32 %v520, %v584
  %586 = vmatmul.f32.gmra.mxu0 %v95
  %v587 = vpop.f32.mrf.mxu0
  %v588 = vadd.f32 %v523, %v587
  %589 = vmatmul.f32.gmra.mxu0 %v102
  %v590 = vpop.f32.mrf.mxu0
  %v591 = vadd.f32 %v526, %v590
  %592 = vmatmul.f32.gmra.mxu0 %v109
  %v593 = vpop.f32.mrf.mxu0
  %v594 = vadd.f32 %v529, %v593
  %595 = vmatmul.f32.gmra.mxu0 %v116
  %v596 = vpop.f32.mrf.mxu0
  %v597 = vadd.f32 %v532, %v596
  %598 = vmatmul.f32.gmra.mxu0 %v123
  %v599 = vpop.f32.mrf.mxu0
  %v600 = vadd.f32 %v535, %v599
  %601 = vdwg.mxu0
  %602 = vmatpush.msra.mxu0 %v221
  %603 = vmatpush.msra.mxu0 %v220
  %604 = vmatpush.msra.mxu0 %v219
  %605 = vmatpush.msra.mxu0 %v218
  %606 = vmatpush.msra.mxu0 %v217
  %607 = vmatpush.msra.mxu0 %v216
  %608 = vmatpush.msra.mxu0 %v215
  %609 = vmatpush.msra.mxu0 %v214
  %610 = vmatpush.msra.mxu0 %v213
  %611 = vmatpush.msra.mxu0 %v212
  %612 = vmatpush.msra.mxu0 %v211
  %613 = vmatpush.msra.mxu0 %v210
  %614 = vmatpush.msra.mxu0 %v209
  %615 = vmatpush.msra.mxu0 %v208
  %616 = vmatpush.msra.mxu0 %v207
  %617 = vmatpush.msra.mxu0 %v206
  %618 = vmatmul.f32.gmra.mxu0 %v19
  %v619 = vpop.f32.mrf.mxu0
  %v620 = vadd.f32 %v555, %v619
  %621 = vmatmul.f32.gmra.mxu0 %v26
  %v622 = vpop.f32.mrf.mxu0
  %v623 = vadd.f32 %v558, %v622
  %624 = vmatmul.f32.gmra.mxu0 %v33
  %v625 = vpop.f32.mrf.mxu0
  %v626 = vadd.f32 %v561, %v625
  %627 = vmatmul.f32.gmra.mxu0 %v40
  %v628 = vpop.f32.mrf.mxu0
  %v629 = vadd.f32 %v564, %v628
  %630 = vmatmul.f32.gmra.mxu0 %v47
  %v631 = vpop.f32.mrf.mxu0
  %v632 = vadd.f32 %v567, %v631
  %633 = vmatmul.f32.gmra.mxu0 %v54
  %v634 = vpop.f32.mrf.mxu0
  %v635 = vadd.f32 %v570, %v634
  %636 = vmatmul.f32.gmra.mxu0 %v61
  %v637 = vpop.f32.mrf.mxu0
  %v638 = vadd.f32 %v573, %v637
  %639 = vmatmul.f32.gmra.mxu0 %v68
  %v640 = vpop.f32.mrf.mxu0
  %v641 = vadd.f32 %v576, %v640
  %642 = vmatmul.f32.gmra.mxu0 %v75
  %v643 = vpop.f32.mrf.mxu0
  %v644 = vadd.f32 %v579, %v643
  %645 = vmatmul.f32.gmra.mxu0 %v82
  %v646 = vpop.f32.mrf.mxu0
  %v647 = vadd.f32 %v582, %v646
  %648 = vmatmul.f32.gmra.mxu0 %v89
  %v649 = vpop.f32.mrf.mxu0
  %v650 = vadd.f32 %v585, %v649
  %651 = vmatmul.f32.gmra.mxu0 %v96
  %v652 = vpop.f32.mrf.mxu0
  %v653 = vadd.f32 %v588, %v652
  %654 = vmatmul.f32.gmra.mxu0 %v103
  %v655 = vpop.f32.mrf.mxu0
  %v656 = vadd.f32 %v591, %v655
  %657 = vmatmul.f32.gmra.mxu0 %v110
  %v658 = vpop.f32.mrf.mxu0
  %v659 = vadd.f32 %v594, %v658
  %660 = vmatmul.f32.gmra.mxu0 %v117
  %v661 = vpop.f32.mrf.mxu0
  %v662 = vadd.f32 %v597, %v661
  %663 = vmatmul.f32.gmra.mxu0 %v124
  %v664 = vpop.f32.mrf.mxu0
  %v665 = vadd.f32 %v600, %v664
  %666 = vdwg.mxu0
  %667 = vmatpush.msra.mxu0 0.0
  %668 = vmatpush.msra.mxu0 0.0
  %669 = vmatpush.msra.mxu0 0.0
  %670 = vmatpush.msra.mxu0 0.0
  %671 = vmatpush.msra.mxu0 0.0
  %672 = vmatpush.msra.mxu0 0.0
  %673 = vmatpush.msra.mxu0 0.0
  %674 = vmatpush.msra.mxu0 0.0
  %675 = vmatpush.msra.mxu0 0.0
  %676 = vmatpush.msra.mxu0 0.0
  %677 = vmatpush.msra.mxu0 0.0
  %678 = vmatpush.msra.mxu0 0.0
  %679 = vmatpush.msra.mxu0 0.0
  %680 = vmatpush.msra.mxu0 0.0
  %681 = vmatpush.msra.mxu0 %v223
  %682 = vmatpush.msra.mxu0 %v222
  %683 = vmatmul.f32.gmra.mxu0 %v230
  %v684 = vpop.f32.mrf.mxu0
  %v685 = vadd.f32 %v620, %v684
  %686 = vmatmul.f32.gmra.mxu0 %v233
  %v687 = vpop.f32.mrf.mxu0
  %v688 = vadd.f32 %v623, %v687
  %689 = vmatmul.f32.gmra.mxu0 %v236
  %v690 = vpop.f32.mrf.mxu0
  %v691 = vadd.f32 %v626, %v690
  %692 = vmatmul.f32.gmra.mxu0 %v239
  %v693 = vpop.f32.mrf.mxu0
  %v694 = vadd.f32 %v629, %v693
  %695 = vmatmul.f32.gmra.mxu0 %v242
  %v696 = vpop.f32.mrf.mxu0
  %v697 = vadd.f32 %v632, %v696
  %698 = vmatmul.f32.gmra.mxu0 %v245
  %v699 = vpop.f32.mrf.mxu0
  %v700 = vadd.f32 %v635, %v699
  %701 = vmatmul.f32.gmra.mxu0 %v248
  %v702 = vpop.f32.mrf.mxu0
  %v703 = vadd.f32 %v638, %v702
  %704 = vmatmul.f32.gmra.mxu0 %v251
  %v705 = vpop.f32.mrf.mxu0
  %v706 = vadd.f32 %v641, %v705
  %707 = vmatmul.f32.gmra.mxu0 %v254
  %v708 = vpop.f32.mrf.mxu0
  %v709 = vadd.f32 %v644, %v708
  %710 = vmatmul.f32.gmra.mxu0 %v257
  %v711 = vpop.f32.mrf.mxu0
  %v712 = vadd.f32 %v647, %v711
  %713 = vmatmul.f32.gmra.mxu0 %v260
  %v714 = vpop.f32.mrf.mxu0
  %v715 = vadd.f32 %v650, %v714
  %716 = vmatmul.f32.gmra.mxu0 %v263
  %v717 = vpop.f32.mrf.mxu0
  %v718 = vadd.f32 %v653, %v717
  %719 = vmatmul.f32.gmra.mxu0 %v266
  %v720 = vpop.f32.mrf.mxu0
  %v721 = vadd.f32 %v656, %v720
  %722 = vmatmul.f32.gmra.mxu0 %v269
  %v723 = vpop.f32.mrf.mxu0
  %v724 = vadd.f32 %v659, %v723
  %725 = vmatmul.f32.gmra.mxu0 %v272
  %v726 = vpop.f32.mrf.mxu0
  %v727 = vadd.f32 %v662, %v726
  %728 = vmatmul.f32.gmra.mxu0 %v275
  %v729 = vpop.f32.mrf.mxu0
  %v730 = vadd.f32 %v665, %v729
  %731 = vdwg.mxu0
  %732 = vst [vmem:[%s3] sm:$0xff] %v685
  %733 = vst [vmem:[%s3 + $0x8] sm:$0xff] %v688
  %734 = vst [vmem:[%s3 + $0x10] sm:$0xff] %v691
  %735 = vst [vmem:[%s3 + $0x18] sm:$0xff] %v694
  %736 = vst [vmem:[%s3 + $0x20] sm:$0xff] %v697
  %737 = vst [vmem:[%s3 + $0x28] sm:$0xff] %v700
  %738 = vst [vmem:[%s3 + $0x30] sm:$0xff] %v703
  %739 = vst [vmem:[%s3 + $0x38] sm:$0xff] %v706
  %740 = vst [vmem:[%s3 + $0x40] sm:$0xff] %v709
  %741 = vst [vmem:[%s3 + $0x48] sm:$0xff] %v712
  %742 = vst [vmem:[%s3 + $0x50] sm:$0xff] %v715
  %743 = vst [vmem:[%s3 + $0x58] sm:$0xff] %v718
  %744 = vst [vmem:[%s3 + $0x60] sm:$0xff] %v721
  %745 = vst [vmem:[%s3 + $0x68] sm:$0xff] %v724
  %746 = vst [vmem:[%s3 + $0x70] sm:$0xff] %v727
  %747 = vst [vmem:[%s3 + $0x78] sm:$0xff] %v730
  // Predicated region
  $region14: #{softmax_regression_forward.1} parent=0 // pred_check
    _
  $region15: #{softmax_regression_forward.1} parent=0 // pred_check_branch
    %749 = sbr.rel (0) target = $region17
  $region16: #{softmax_regression_forward.1} parent=0 // pred_region
    _
  $region17: #{softmax_regression_forward.1} parent=0 // pred_fallthru
    _
  // Predicated region
  $region18: #{softmax_regression_forward.1} parent=0 // pred_check
    _
  $region19: #{softmax_regression_forward.1} parent=0 // pred_check_branch
    %751 = sbr.rel (0) target = $region21
  $region20: #{softmax_regression_forward.1} parent=0 // pred_region
    _
  $region21: #{softmax_regression_forward.1} parent=0 // pred_fallthru
    _

</llo_original>
